<compile_context>
chip_gen: v7x
topology: tpu7x:2x2x1
jax: 0.10.0
libtpu: 0.0.40
codegen_flags: <defaults>
</compile_context>

<pallas_src>
import jax
import jax.numpy as jnp
from jax.experimental import pallas as pl
from jax.experimental.pallas import tpu as pltpu

_LANES = 128        # full TPU lane width -> unmasked vector stores
_TILE_ROWS = 8192   # 8192 * 128 * 4B = 4 MiB per f32 tile (2 MiB for bf16)


def _identity_kernel(x_ref, o_ref):
    # Elementwise identity: the entire forward pass of the module.
    o_ref[...] = x_ref[...]


def _identity_copy_2d(x2d):
    """Tiled, pipelined identity copy of a lane-dense (rows, 128) slab."""
    rows, lanes = x2d.shape

    if rows <= _TILE_ROWS:
        # Single full-array block: no grid-step overhead, no (8,128) constraint.
        tile_rows = rows
        grid = (1,)
    else:
        # Large tiles; Pallas masks the overhanging tail block automatically.
        tile_rows = _TILE_ROWS
        grid = (pl.cdiv(rows, tile_rows),)

    return pl.pallas_call(
        _identity_kernel,
        out_shape=jax.ShapeDtypeStruct(x2d.shape, x2d.dtype),
        grid=grid,
        in_specs=[pl.BlockSpec((tile_rows, lanes), lambda i: (i, 0))],
        out_specs=pl.BlockSpec((tile_rows, lanes), lambda i: (i, 0)),
        compiler_params=pltpu.CompilerParams(
            dimension_semantics=("parallel",),
            vmem_limit_bytes=32 << 20,  # explicit: safe on v5e/v6e/v7x
        ),
    )(x2d)


def model_forward(x, w1=None, b1=None, w2=None, bias=True, bias2=None):
    """Reproduces Model.forward: returns x unchanged (same shape & dtype).

    w1, b1, w2, bias, bias2 — and the module's conv/linear parameters — are
    accepted but, exactly like the PyTorch module, never touch the output, so
    they are deliberately kept out of the Pallas call / traced path.
    """
    orig_shape = x.shape
    total = x.size

    if total == 0:
        # Empty tensor: nothing to copy.
        return x

    flat = x.reshape(total)
    rem = total % _LANES
    if rem != 0:
        # Pad up to a multiple of 128 so the copy is lane-dense (unmasked stores).
        flat = jnp.pad(flat, (0, _LANES - rem))

    x2d = flat.reshape(-1, _LANES)
    out2d = _identity_copy_2d(x2d)

    out_flat = out2d.reshape(-1)
    if rem != 0:
        out_flat = out_flat[:total]
    return out_flat.reshape(orig_shape)


if __name__ == "__main__":
    key = jax.random.PRNGKey(0)
    kx, kw1, kb1, kw2 = jax.random.split(key, 4)

    # Input shape from the original spec (NCHW, 3 channels as the unused conv expects).
    # 1*3*107*199 = 63879 elements -> exercises the lane-padding path as well.
    x = jax.random.normal(kx, (1, 3, 107, 199), jnp.float32)

    # Extra forward args (unused by the forward pass, mirrored for signature fidelity).
    w1 = jax.random.normal(kw1, (4, 4), jnp.float32)
    b1 = jax.random.normal(kb1, (4,), jnp.float32)
    w2 = jax.random.normal(kw2, (4, 4), jnp.float32)
    bias2 = jnp.array([-1.5], jnp.float32)

    out = model_forward(x, w1, b1, w2, bias=True, bias2=bias2)
    out = jax.block_until_ready(out)

    assert out.shape == x.shape and out.dtype == x.dtype
    assert bool(jnp.all(out == x))
    print("KERNEL_OK")
</pallas_src>

<mosaic_0001>
module attributes {stable_mosaic.version = 11 : i64} {
  func.func @_identity_kernel(%arg0: i32, %arg1: memref<500x128xf32, #tpu.memory_space<vmem>>, %arg2: memref<500x128xf32, #tpu.memory_space<vmem>>) attributes {dimension_semantics = [#tpu.dimension_semantics<parallel>], iteration_bounds = array<i64: 1>, scalar_prefetch = 0 : i64, scratch_operands = 0 : i64, tpu.core_type = #tpu.core_type<tc>, window_params = [{transform_indices = @transform_0, window_bounds = array<i64: 500, 128>}, {transform_indices = @transform_1, window_bounds = array<i64: 500, 128>}]} {
    %c0 = arith.constant 0 : index
    %c0_0 = arith.constant 0 : index
    %0 = vector.load %arg1[%c0, %c0_0] : memref<500x128xf32, #tpu.memory_space<vmem>>, vector<500x128xf32>
    %c0_1 = arith.constant 0 : index
    %c0_2 = arith.constant 0 : index
    %1 = vector.load %arg2[%c0_1, %c0_2] : memref<500x128xf32, #tpu.memory_space<vmem>>, vector<500x128xf32>
    tpu.vector_store %arg2[%c0_1, %c0_2], %0 {strides = array<i32>} : memref<500x128xf32, #tpu.memory_space<vmem>>, vector<500x128xf32>,
    return
  }
  func.func @transform_0(%arg0: i32) -> (i32, i32) {
    %c0_i32 = arith.constant 0 : i32
    %c0_i32_0 = arith.constant 0 : i32
    return %arg0, %c0_i32 : i32, i32
  }
  func.func @transform_1(%arg0: i32) -> (i32, i32) {
    %c0_i32 = arith.constant 0 : i32
    %c0_i32_0 = arith.constant 0 : i32
    return %arg0, %c0_i32 : i32, i32
  }
}

</mosaic_0001>

<llo_original>
// kernel: tpu_custom_call.1
$region0: #{tpu_custom_call.1}
  #allocation0 [shape = 'u32[]', space=smem, size = 0x4, offset = 0x4, fixed_abs, tag = 'smem constant byte address 0x4 - core index']
  #allocation1 [shape = 'u32[144,128]{1,0:T(1,128)}', space=vmem, size = 0x12000, scoped, tag = 'internal scratch']
  %s0 = inlined_call_operand.hbm [shape: f32[500,128], index: 0, kind: input, shape index: {}]
  %s1 = inlined_call_operand.hbm [shape: f32[500,128], index: 1, kind: output, shape index: {}]
  %s2 = sld [smem:[#allocation0]]
  $region18: #{tpu_custom_call.1} parent=0
    _
  %s4 = ssub.s32 1, %s2
  %s5 = scalar_select 0, %s4, %s2
  $region1: #{tpu_custom_call.1} parent=0
    #allocation2 [shape = 'u8[258048]{0}', space=vmem, size = 0x3f000, scoped, tag = 'input window, operand 0, single buffered']
    #allocation3 [shape = 's32[1]{0}', space=sflag, size = 0x4, scoped, tag = 'scoped memory for tpu_custom_call.1']
    #allocation4 [shape = 's32[1]{0}', space=sflag, size = 0x4, scoped, tag = 'scoped memory for tpu_custom_call.1']
    #allocation5 [shape = 'u8[258048]{0}', space=vmem, size = 0x3f000, scoped, tag = 'output window, operand 0, single buffered']
    %6 = vsyncpa [#allocation3], 0
    %7 = vsyncpa [#allocation4], 0
    // Predicated region
    $region2: #{tpu_custom_call.1} parent=1 // pred_check
      _
    $region3: #{tpu_custom_call.1} parent=1 // pred_check_branch
      %9 = sbr.rel (0) target = $region5
    $region4: #{tpu_custom_call.1} parent=1 // pred_region
      %s11 = ssub.s32 8064, 8064
      %12 = vsyncadd [#allocation3], %s11
      %s13 = sshll.u32 [#allocation2], 4
      %s14 = int_to_ptr.vmem [resolvable:$true] %s13
      %19 = dma.hbm_to_vmem [thread:$0]  %s0, 8064, %s14, [#allocation3], 128, 128, 8
    $region5: #{tpu_custom_call.1} parent=1 // pred_fallthru
      _
    // Predicated region
    $region6: #{tpu_custom_call.1} parent=1 // pred_check
      _
    $region7: #{tpu_custom_call.1} parent=1 // pred_check_branch
      %21 = sbr.rel (0) target = $region9
    $region8: #{tpu_custom_call.1} parent=1 // pred_region
      %22 = dma.done [#allocation3], 8064
    $region9: #{tpu_custom_call.1} parent=1 // pred_fallthru
      _
    %v23 = vld [vmem:[#allocation2] sm:$0xff]
    %v24 = vld [vmem:[#allocation2 + $0x8] sm:$0xff]
    %v25 = vld [vmem:[#allocation2 + $0x10] sm:$0xff]
    %v26 = vld [vmem:[#allocation2 + $0x18] sm:$0xff]
    %v27 = vld [vmem:[#allocation2 + $0x20] sm:$0xff]
    %v28 = vld [vmem:[#allocation2 + $0x28] sm:$0xff]
    %v29 = vld [vmem:[#allocation2 + $0x30] sm:$0xff]
    %v30 = vld [vmem:[#allocation2 + $0x38] sm:$0xff]
    %v31 = vld [vmem:[#allocation2 + $0x40] sm:$0xff]
    %v32 = vld [vmem:[#allocation2 + $0x48] sm:$0xff]
    %v33 = vld [vmem:[#allocation2 + $0x50] sm:$0xff]
    %v34 = vld [vmem:[#allocation2 + $0x58] sm:$0xff]
    %v35 = vld [vmem:[#allocation2 + $0x60] sm:$0xff]
    %v36 = vld [vmem:[#allocation2 + $0x68] sm:$0xff]
    %v37 = vld [vmem:[#allocation2 + $0x70] sm:$0xff]
    %v38 = vld [vmem:[#allocation2 + $0x78] sm:$0xff]
    %v39 = vld [vmem:[#allocation2 + $0x80] sm:$0xff]
    %v40 = vld [vmem:[#allocation2 + $0x88] sm:$0xff]
    %v41 = vld [vmem:[#allocation2 + $0x90] sm:$0xff]
    %v42 = vld [vmem:[#allocation2 + $0x98] sm:$0xff]
    %v43 = vld [vmem:[#allocation2 + $0xa0] sm:$0xff]
    %v44 = vld [vmem:[#allocation2 + $0xa8] sm:$0xff]
    %v45 = vld [vmem:[#allocation2 + $0xb0] sm:$0xff]
    %v46 = vld [vmem:[#allocation2 + $0xb8] sm:$0xff]
    %v47 = vld [vmem:[#allocation2 + $0xc0] sm:$0xff]
    %v48 = vld [vmem:[#allocation2 + $0xc8] sm:$0xff]
    %v49 = vld [vmem:[#allocation2 + $0xd0] sm:$0xff]
    %v50 = vld [vmem:[#allocation2 + $0xd8] sm:$0xff]
    %v51 = vld [vmem:[#allocation2 + $0xe0] sm:$0xff]
    %v52 = vld [vmem:[#allocation2 + $0xe8] sm:$0xff]
    %v53 = vld [vmem:[#allocation2 + $0xf0] sm:$0xff]
    %v54 = vld [vmem:[#allocation2 + $0xf8] sm:$0xff]
    %v55 = vld [vmem:[#allocation2 + $0x100] sm:$0xff]
    %v56 = vld [vmem:[#allocation2 + $0x108] sm:$0xff]
    %v57 = vld [vmem:[#allocation2 + $0x110] sm:$0xff]
    %v58 = vld [vmem:[#allocation2 + $0x118] sm:$0xff]
    %v59 = vld [vmem:[#allocation2 + $0x120] sm:$0xff]
    %v60 = vld [vmem:[#allocation2 + $0x128] sm:$0xff]
    %v61 = vld [vmem:[#allocation2 + $0x130] sm:$0xff]
    %v62 = vld [vmem:[#allocation2 + $0x138] sm:$0xff]
    %v63 = vld [vmem:[#allocation2 + $0x140] sm:$0xff]
    %v64 = vld [vmem:[#allocation2 + $0x148] sm:$0xff]
    %v65 = vld [vmem:[#allocation2 + $0x150] sm:$0xff]
    %v66 = vld [vmem:[#allocation2 + $0x158] sm:$0xff]
    %v67 = vld [vmem:[#allocation2 + $0x160] sm:$0xff]
    %v68 = vld [vmem:[#allocation2 + $0x168] sm:$0xff]
    %v69 = vld [vmem:[#allocation2 + $0x170] sm:$0xff]
    %v70 = vld [vmem:[#allocation2 + $0x178] sm:$0xff]
    %v71 = vld [vmem:[#allocation2 + $0x180] sm:$0xff]
    %v72 = vld [vmem:[#allocation2 + $0x188] sm:$0xff]
    %v73 = vld [vmem:[#allocation2 + $0x190] sm:$0xff]
    %v74 = vld [vmem:[#allocation2 + $0x198] sm:$0xff]
    %v75 = vld [vmem:[#allocation2 + $0x1a0] sm:$0xff]
    %v76 = vld [vmem:[#allocation2 + $0x1a8] sm:$0xff]
    %v77 = vld [vmem:[#allocation2 + $0x1b0] sm:$0xff]
    %v78 = vld [vmem:[#allocation2 + $0x1b8] sm:$0xff]
    %v79 = vld [vmem:[#allocation2 + $0x1c0] sm:$0xff]
    %v80 = vld [vmem:[#allocation2 + $0x1c8] sm:$0xff]
    %v81 = vld [vmem:[#allocation2 + $0x1d0] sm:$0xff]
    %v82 = vld [vmem:[#allocation2 + $0x1d8] sm:$0xff]
    %v83 = vld [vmem:[#allocation2 + $0x1e0] sm:$0xff]
    %v84 = vld [vmem:[#allocation2 + $0x1e8] sm:$0xff]
    %v85 = vld [vmem:[#allocation2 + $0x1f0] sm:$0xf]
    %86 = vst [vmem:[#allocation5] sm:$0xff] %v23
    %87 = vst [vmem:[#allocation5 + $0x8] sm:$0xff] %v24
    %88 = vst [vmem:[#allocation5 + $0x10] sm:$0xff] %v25
    %89 = vst [vmem:[#allocation5 + $0x18] sm:$0xff] %v26
    %90 = vst [vmem:[#allocation5 + $0x20] sm:$0xff] %v27
    %91 = vst [vmem:[#allocation5 + $0x28] sm:$0xff] %v28
    %92 = vst [vmem:[#allocation5 + $0x30] sm:$0xff] %v29
    %93 = vst [vmem:[#allocation5 + $0x38] sm:$0xff] %v30
    %94 = vst [vmem:[#allocation5 + $0x40] sm:$0xff] %v31
    %95 = vst [vmem:[#allocation5 + $0x48] sm:$0xff] %v32
    %96 = vst [vmem:[#allocation5 + $0x50] sm:$0xff] %v33
    %97 = vst [vmem:[#allocation5 + $0x58] sm:$0xff] %v34
    %98 = vst [vmem:[#allocation5 + $0x60] sm:$0xff] %v35
    %99 = vst [vmem:[#allocation5 + $0x68] sm:$0xff] %v36
    %100 = vst [vmem:[#allocation5 + $0x70] sm:$0xff] %v37
    %101 = vst [vmem:[#allocation5 + $0x78] sm:$0xff] %v38
    %102 = vst [vmem:[#allocation5 + $0x80] sm:$0xff] %v39
    %103 = vst [vmem:[#allocation5 + $0x88] sm:$0xff] %v40
    %104 = vst [vmem:[#allocation5 + $0x90] sm:$0xff] %v41
    %105 = vst [vmem:[#allocation5 + $0x98] sm:$0xff] %v42
    %106 = vst [vmem:[#allocation5 + $0xa0] sm:$0xff] %v43
    %107 = vst [vmem:[#allocation5 + $0xa8] sm:$0xff] %v44
    %108 = vst [vmem:[#allocation5 + $0xb0] sm:$0xff] %v45
    %109 = vst [vmem:[#allocation5 + $0xb8] sm:$0xff] %v46
    %110 = vst [vmem:[#allocation5 + $0xc0] sm:$0xff] %v47
    %111 = vst [vmem:[#allocation5 + $0xc8] sm:$0xff] %v48
    %112 = vst [vmem:[#allocation5 + $0xd0] sm:$0xff] %v49
    %113 = vst [vmem:[#allocation5 + $0xd8] sm:$0xff] %v50
    %114 = vst [vmem:[#allocation5 + $0xe0] sm:$0xff] %v51
    %115 = vst [vmem:[#allocation5 + $0xe8] sm:$0xff] %v52
    %116 = vst [vmem:[#allocation5 + $0xf0] sm:$0xff] %v53
    %117 = vst [vmem:[#allocation5 + $0xf8] sm:$0xff] %v54
    %118 = vst [vmem:[#allocation5 + $0x100] sm:$0xff] %v55
    %119 = vst [vmem:[#allocation5 + $0x108] sm:$0xff] %v56
    %120 = vst [vmem:[#allocation5 + $0x110] sm:$0xff] %v57
    %121 = vst [vmem:[#allocation5 + $0x118] sm:$0xff] %v58
    %122 = vst [vmem:[#allocation5 + $0x120] sm:$0xff] %v59
    %123 = vst [vmem:[#allocation5 + $0x128] sm:$0xff] %v60
    %124 = vst [vmem:[#allocation5 + $0x130] sm:$0xff] %v61
    %125 = vst [vmem:[#allocation5 + $0x138] sm:$0xff] %v62
    %126 = vst [vmem:[#allocation5 + $0x140] sm:$0xff] %v63
    %127 = vst [vmem:[#allocation5 + $0x148] sm:$0xff] %v64
    %128 = vst [vmem:[#allocation5 + $0x150] sm:$0xff] %v65
    %129 = vst [vmem:[#allocation5 + $0x158] sm:$0xff] %v66
    %130 = vst [vmem:[#allocation5 + $0x160] sm:$0xff] %v67
    %131 = vst [vmem:[#allocation5 + $0x168] sm:$0xff] %v68
    %132 = vst [vmem:[#allocation5 + $0x170] sm:$0xff] %v69
    %133 = vst [vmem:[#allocation5 + $0x178] sm:$0xff] %v70
    %134 = vst [vmem:[#allocation5 + $0x180] sm:$0xff] %v71
    %135 = vst [vmem:[#allocation5 + $0x188] sm:$0xff] %v72
    %136 = vst [vmem:[#allocation5 + $0x190] sm:$0xff] %v73
    %137 = vst [vmem:[#allocation5 + $0x198] sm:$0xff] %v74
    %138 = vst [vmem:[#allocation5 + $0x1a0] sm:$0xff] %v75
    %139 = vst [vmem:[#allocation5 + $0x1a8] sm:$0xff] %v76
    %140 = vst [vmem:[#allocation5 + $0x1b0] sm:$0xff] %v77
    %141 = vst [vmem:[#allocation5 + $0x1b8] sm:$0xff] %v78
    %142 = vst [vmem:[#allocation5 + $0x1c0] sm:$0xff] %v79
    %143 = vst [vmem:[#allocation5 + $0x1c8] sm:$0xff] %v80
    %144 = vst [vmem:[#allocation5 + $0x1d0] sm:$0xff] %v81
    %145 = vst [vmem:[#allocation5 + $0x1d8] sm:$0xff] %v82
    %146 = vst [vmem:[#allocation5 + $0x1e0] sm:$0xff] %v83
    %147 = vst [vmem:[#allocation5 + $0x1e8] sm:$0xff] %v84
    %148 = vst [vmem:[#allocation5 + $0x1f0] sm:$0xf] %v85
    // Predicated region
    $region10: #{tpu_custom_call.1} parent=1 // pred_check
      _
    $region11: #{tpu_custom_call.1} parent=1 // pred_check_branch
      %150 = sbr.rel (0) target = $region13
    $region12: #{tpu_custom_call.1} parent=1 // pred_region
      %s152 = ssub.s32 8064, 8064
      %153 = vsyncadd [#allocation4], %s152
      %s154 = sshll.u32 [#allocation5], 4
      %s155 = int_to_ptr.vmem [resolvable:$true] %s154
      %160 = dma.vmem_to_hbm [thread:$0]  %s155, 8064, %s1, [#allocation4], 128, 128, 8
    $region13: #{tpu_custom_call.1} parent=1 // pred_fallthru
      _
    // Predicated region
    $region14: #{tpu_custom_call.1} parent=1 // pred_check
      _
    $region15: #{tpu_custom_call.1} parent=1 // pred_check_branch
      %162 = sbr.rel (0) target = $region17
    $region16: #{tpu_custom_call.1} parent=1 // pred_region
      %163 = dma.done [#allocation4], 8064
    $region17: #{tpu_custom_call.1} parent=1 // pred_fallthru
      _
    %164 = vsyncpa [#allocation3], 1
    %165 = vsyncpa [#allocation4], 1

</llo_original>
